<compile_context>
chip_gen: v7x
topology: tpu7x:2x2x1
jax: 0.10.0
libtpu: 0.0.40
codegen_flags: <defaults>
</compile_context>

<pallas_src>
import functools
import math

import jax
import jax.numpy as jnp
from jax import lax
from jax.experimental import pallas as pl
from jax.experimental.pallas import tpu as pltpu


# ----------------------------------------------------------------------------
# Buffer setup (deterministic, mirrors nn.Module.__init__)
# ----------------------------------------------------------------------------
def make_pe_table(d_model: int, max_len: int = 5000) -> jnp.ndarray:
    """Sinusoidal positional-encoding table, shape (max_len, d_model), f32."""
    position = jnp.arange(0, max_len, dtype=jnp.float32)[:, None]            # (L, 1)
    div_term = jnp.exp(
        jnp.arange(0, d_model, 2, dtype=jnp.float32) * (-math.log(10000.0) / d_model)
    )                                                                         # (d_model/2,)
    pe = jnp.zeros((max_len, d_model), dtype=jnp.float32)
    pe = pe.at[:, 0::2].set(jnp.sin(position * div_term))
    pe = pe.at[:, 1::2].set(jnp.cos(position * div_term))
    return pe


# ----------------------------------------------------------------------------
# Pallas kernel: y = dropout(x + pe)  (inverted dropout, p=dropout_p)
# ----------------------------------------------------------------------------
def _pe_kernel(seed_ref, x_ref, pe_ref, o_ref, *,
               dropout_p: float, training: bool, batch_leading: bool,
               tile_s: int, dims):
    x = x_ref[...]                       # (B, tS, D) if batch_leading else (tS, B, D)
    pe = pe_ref[...]                     # (tS, D)
    if batch_leading:
        y = x + pe[None, :, :]
    else:
        y = x + pe[:, None, :]

    if training and dropout_p > 0.0:
        S, B, D = dims
        shape = x.shape
        # Global (seq, batch, dmodel) flat index per element -> stateless hash RNG.
        i0 = lax.broadcasted_iota(jnp.int32, shape, 0)
        i1 = lax.broadcasted_iota(jnp.int32, shape, 1)
        i2 = lax.broadcasted_iota(jnp.int32, shape, 2)
        s_off = pl.program_id(0) * tile_s
        if batch_leading:                # block (B, tS, D), tiled over axis 1
            flat = ((i1 + s_off) * B + i0) * D + i2
        else:                            # block (tS, B, D), tiled over axis 0
            flat = ((i0 + s_off) * B + i1) * D + i2
        # lowbias32-style integer mixer; int32 wrap-around arithmetic + logical
        # shifts give bit patterns identical to the uint32 reference hash.
        h = flat + seed_ref[0] * jnp.int32(-1640531527)            # 0x9E3779B9
        h = h ^ lax.shift_right_logical(h, 16)
        h = h * jnp.int32(2145916205)                              # 0x7FEB352D
        h = h ^ lax.shift_right_logical(h, 15)
        h = h * jnp.int32(-2073287029)                             # 0x846CA68B
        h = h ^ lax.shift_right_logical(h, 16)
        u31 = h & jnp.int32(0x7FFFFFFF)                            # 31 uniform bits
        thr = jnp.int32(min(int(dropout_p * 2147483648.0), 0x7FFFFFFF))
        keep = u31 >= thr                                          # P(keep) = 1 - p
        scale = jnp.float32(1.0 / (1.0 - dropout_p))
        y = jnp.where(keep, y * scale, jnp.zeros_like(y))

    o_ref[...] = y.astype(o_ref.dtype)


def _choose_tile_s(S: int, B: int, D: int, itemsize: int,
                   target_bytes: int = 1 << 20) -> int:
    """Largest sequence tile with an x block of ~<=1 MiB (multiple of 8 rows)."""
    # ~1 MiB per x block -> double-buffered in+out ~4-5 MiB: safe under v5e's
    # 16 MiB scoped-VMEM default and v7x's smaller 64 MiB physical VMEM, while
    # big enough (>=512 KiB for realistic B*D) to amortize per-grid-step overhead.
    row_bytes = B * D * itemsize
    t = max(1, target_bytes // max(row_bytes, 1))
    if t >= S:
        return S
    # pe block is (tS, D): tS must be a multiple of 8 (sublanes) unless it equals S.
    t = max(8, (t // 8) * 8)
    # TODO(synk): for extreme B*D (>~1 MiB per sequence row) also tile the d_model axis.
    return min(t, S)


def positional_encoding(x, pe_table, *, dropout_p=0.1, training=False, seed=0):
    """x: (seq, batch, d_model).  Returns inverted-dropout(x + pe[:seq])."""
    S, B, D = x.shape
    pe_slice = pe_table[:S, :].astype(x.dtype)     # keep pe at 1/B of x's HBM traffic
    seed_arr = jnp.array([seed], dtype=jnp.int32)

    # Small batch (< 8 sublanes): present data as (B, S, D) so sublanes come from
    # the sequence axis (full fill) rather than a tiny batch axis.
    batch_leading = B < 8
    x_in = jnp.transpose(x, (1, 0, 2)) if batch_leading else x

    tile_s = _choose_tile_s(S, B, D, jnp.dtype(x.dtype).itemsize)
    grid = (pl.cdiv(S, tile_s),)

    if batch_leading:
        xo_spec = pl.BlockSpec((B, tile_s, D), lambda i, seed: (0, i, 0))
        out_shape = jax.ShapeDtypeStruct((B, S, D), x.dtype)
    else:
        xo_spec = pl.BlockSpec((tile_s, B, D), lambda i, seed: (i, 0, 0))
        out_shape = jax.ShapeDtypeStruct((S, B, D), x.dtype)
    pe_spec = pl.BlockSpec((tile_s, D), lambda i, seed: (i, 0))

    kernel = functools.partial(
        _pe_kernel, dropout_p=float(dropout_p), training=bool(training),
        batch_leading=batch_leading, tile_s=tile_s, dims=(S, B, D))

    out = pl.pallas_call(
        kernel,
        out_shape=out_shape,
        grid_spec=pltpu.PrefetchScalarGridSpec(
            num_scalar_prefetch=1,                 # seed -> SMEM
            grid=grid,
            in_specs=[xo_spec, pe_spec],
            out_specs=xo_spec,
        ),
        compiler_params=pltpu.CompilerParams(
            # Sequence tiles are independent -> shard across v7x's 2 TensorCores.
            dimension_semantics=("parallel",),
        ),
    )(seed_arr, x_in, pe_slice)

    return jnp.transpose(out, (1, 0, 2)) if batch_leading else out


# ----------------------------------------------------------------------------
# Driver
# ----------------------------------------------------------------------------
if __name__ == "__main__":
    seq_len, batch, d_model = 8, 2, 32
    max_len = 64  # small synthetic max_len (module default is 5000)

    key = jax.random.PRNGKey(0)
    x = jax.random.normal(key, (seq_len, batch, d_model), dtype=jnp.float32)

    pe_table = make_pe_table(d_model, max_len)

    # Eval-mode path (dropout is identity) -- deterministic, check against reference.
    out_eval = positional_encoding(x, pe_table, dropout_p=0.1, training=False)
    out_eval = jax.block_until_ready(out_eval)

    ref = x + pe_table[:seq_len][:, None, :]
    assert out_eval.shape == (seq_len, batch, d_model)
    assert jnp.allclose(out_eval, ref, atol=1e-5, rtol=1e-5), "eval-mode mismatch"

    # Training-mode path (inverted dropout, p=0.1).
    out_train = positional_encoding(x, pe_table, dropout_p=0.1, training=True, seed=42)
    out_train = jax.block_until_ready(out_train)
    assert out_train.shape == (seq_len, batch, d_model)
    # Dropout invariant: every element is either 0 or ref/(1-p).
    scaled = ref / (1.0 - 0.1)
    ok = jnp.logical_or(jnp.isclose(out_train, 0.0, atol=1e-6),
                        jnp.isclose(out_train, scaled, atol=1e-4, rtol=1e-4))
    assert bool(jnp.all(ok)), "training-mode dropout invariant violated"
    # Not everything was dropped.
    assert bool(jnp.any(jnp.abs(out_train) > 1e-6)), "dropout dropped everything"

    print("KERNEL_OK")
</pallas_src>

<mosaic_0001>
module attributes {stable_mosaic.version = 11 : i64} {
  func.func @_pe_kernel(%arg0: i32, %arg1: memref<1xi32, #tpu.memory_space<smem>>, %arg2: memref<2x8x32xf32, #tpu.memory_space<vmem>>, %arg3: memref<8x32xf32, #tpu.memory_space<vmem>>, %arg4: memref<2x8x32xf32, #tpu.memory_space<vmem>>) attributes {dimension_semantics = [#tpu.dimension_semantics<parallel>], iteration_bounds = array<i64: 1>, scalar_prefetch = 1 : i64, scratch_operands = 0 : i64, tpu.core_type = #tpu.core_type<tc>, window_params = [{transform_indices = @transform_0, window_bounds = array<i64: 2, 8, 32>}, {transform_indices = @transform_1, window_bounds = array<i64: 8, 32>}, {transform_indices = @transform_2, window_bounds = array<i64: 2, 8, 32>}]} {
    %c0 = arith.constant 0 : index
    %c0_0 = arith.constant 0 : index
    %c0_1 = arith.constant 0 : index
    %0 = vector.load %arg2[%c0, %c0_0, %c0_1] : memref<2x8x32xf32, #tpu.memory_space<vmem>>, vector<2x8x32xf32>
    %c0_2 = arith.constant 0 : index
    %c0_3 = arith.constant 0 : index
    %1 = vector.load %arg3[%c0_2, %c0_3] : memref<8x32xf32, #tpu.memory_space<vmem>>, vector<8x32xf32>
    %2 = vector.shape_cast %1 : vector<8x32xf32> to vector<1x8x32xf32>
    %3 = vector.broadcast %2 : vector<1x8x32xf32> to vector<2x8x32xf32>
    %4 = arith.addf %0, %3 : vector<2x8x32xf32>
    %c0_4 = arith.constant 0 : index
    %c0_5 = arith.constant 0 : index
    %c0_6 = arith.constant 0 : index
    %5 = vector.load %arg4[%c0_4, %c0_5, %c0_6] : memref<2x8x32xf32, #tpu.memory_space<vmem>>, vector<2x8x32xf32>
    tpu.vector_store %arg4[%c0_4, %c0_5, %c0_6], %4 {strides = array<i32>} : memref<2x8x32xf32, #tpu.memory_space<vmem>>, vector<2x8x32xf32>,
    return
  }
  func.func @transform_0(%arg0: i32, %arg1: memref<1xi32, #tpu.memory_space<smem>>) -> (i32, i32, i32) {
    %c0_i32 = arith.constant 0 : i32
    %c0_i32_0 = arith.constant 0 : i32
    %c0_i32_1 = arith.constant 0 : i32
    return %c0_i32, %arg0, %c0_i32_0 : i32, i32, i32
  }
  func.func @transform_1(%arg0: i32, %arg1: memref<1xi32, #tpu.memory_space<smem>>) -> (i32, i32) {
    %c0_i32 = arith.constant 0 : i32
    %c0_i32_0 = arith.constant 0 : i32
    return %arg0, %c0_i32 : i32, i32
  }
  func.func @transform_2(%arg0: i32, %arg1: memref<1xi32, #tpu.memory_space<smem>>) -> (i32, i32, i32) {
    %c0_i32 = arith.constant 0 : i32
    %c0_i32_0 = arith.constant 0 : i32
    %c0_i32_1 = arith.constant 0 : i32
    return %c0_i32, %arg0, %c0_i32_0 : i32, i32, i32
  }
}

</mosaic_0001>

<llo_original>
// kernel: tpu_custom_call.1
$region0: #{tpu_custom_call.1}
  #allocation0 [shape = 'u32[]', space=smem, size = 0x4, offset = 0x4, fixed_abs, tag = 'smem constant byte address 0x4 - core index']
  #allocation1 [shape = 'u32[144,128]{1,0:T(1,128)}', space=vmem, size = 0x12000, scoped, tag = 'internal scratch']
  #allocation2 [shape = 's32[1]{0}', space=sflag, size = 0x4, scoped, tag = 'scoped memory for tpu_custom_call.1']
  #allocation3 [shape = 's32[1]{0:T(128)S(6)}', space=smem, size = 0x200, scoped, tag = 'prefetched SMEM operand 0']
  %s0 = inlined_call_operand.<no memory space> [shape: s32[1], index: 0, kind: input, shape index: {}]
  %s1 = inlined_call_operand.hbm [shape: f32[2,8,32], index: 1, kind: input, shape index: {}]
  %s2 = inlined_call_operand.hbm [shape: f32[8,32], index: 2, kind: input, shape index: {}]
  %s3 = inlined_call_operand.hbm [shape: f32[2,8,32], index: 3, kind: output, shape index: {}]
  %s4 = sld [smem:[#allocation0]]
  $region26: #{tpu_custom_call.1} parent=0
    _
  %s6 = ssub.s32 1, %s4
  %s7 = scalar_select 0, %s6, %s4
  %8 = sst [smem:[#allocation3]] %s0
  $region1: #{tpu_custom_call.1} parent=0
    #allocation4 [shape = 'u8[8192]{0}', space=vmem, size = 0x2000, scoped, tag = 'input window, operand 1, single buffered']
    #allocation5 [shape = 's32[1]{0}', space=sflag, size = 0x4, scoped, tag = 'scoped memory for tpu_custom_call.1']
    #allocation6 [shape = 's32[1]{0}', space=sflag, size = 0x4, scoped, tag = 'scoped memory for tpu_custom_call.1']
    #allocation7 [shape = 'u8[4096]{0}', space=vmem, size = 0x1000, scoped, tag = 'input window, operand 2, single buffered']
    #allocation8 [shape = 's32[1]{0}', space=sflag, size = 0x4, scoped, tag = 'scoped memory for tpu_custom_call.1']
    #allocation9 [shape = 'u8[8192]{0}', space=vmem, size = 0x2000, scoped, tag = 'output window, operand 0, single buffered']
    %9 = vsyncpa [#allocation5], 0
    %10 = vsyncpa [#allocation8], 0
    %11 = vsyncpa [#allocation6], 0
    // Predicated region
    $region2: #{tpu_custom_call.1} parent=1 // pred_check
      _
    $region3: #{tpu_custom_call.1} parent=1 // pred_check_branch
      %13 = sbr.rel (0) target = $region5
    $region4: #{tpu_custom_call.1} parent=1 // pred_region
      %s15 = ssub.s32 256, 256
      %16 = vsyncadd [#allocation5], %s15
      %s17 = sshll.u32 [#allocation4], 4
      %s18 = int_to_ptr.vmem [resolvable:$true] %s17
      %23 = dma.hbm_to_vmem [thread:$0]  %s1, 256, %s18, [#allocation5], 128, 128, 8
    $region5: #{tpu_custom_call.1} parent=1 // pred_fallthru
      _
    // Predicated region
    $region6: #{tpu_custom_call.1} parent=1 // pred_check
      _
    $region7: #{tpu_custom_call.1} parent=1 // pred_check_branch
      %25 = sbr.rel (0) target = $region9
    $region8: #{tpu_custom_call.1} parent=1 // pred_region
      %s27 = ssub.s32 128, 128
      %28 = vsyncadd [#allocation8], %s27
      %s30 = sshll.u32 [#allocation7], 4
      %s31 = int_to_ptr.vmem [resolvable:$true] %s30
      %33 = dma.hbm_to_vmem [thread:$0]  %s2, 128, %s31, [#allocation8]
    $region9: #{tpu_custom_call.1} parent=1 // pred_fallthru
      _
    // Predicated region
    $region10: #{tpu_custom_call.1} parent=1 // pred_check
      _
    $region11: #{tpu_custom_call.1} parent=1 // pred_check_branch
      %35 = sbr.rel (0) target = $region13
    $region12: #{tpu_custom_call.1} parent=1 // pred_region
      %36 = dma.done [#allocation5], 256
    $region13: #{tpu_custom_call.1} parent=1 // pred_fallthru
      _
    // Predicated region
    $region14: #{tpu_custom_call.1} parent=1 // pred_check
      _
    $region15: #{tpu_custom_call.1} parent=1 // pred_check_branch
      %38 = sbr.rel (0) target = $region17
    $region16: #{tpu_custom_call.1} parent=1 // pred_region
      %39 = dma.done [#allocation8], 128
    $region17: #{tpu_custom_call.1} parent=1 // pred_fallthru
      _
    %v40 = vld [vmem:[#allocation4] sm:$0xff]
    %v41 = vld [vmem:[#allocation4 + $0x8] sm:$0xff]
    %v42 = vld [vmem:[#allocation7] sm:$0xff]
    %v43 = vadd.f32 %v40, %v42
    %v44 = vadd.f32 %v41, %v42
    %vm45 = vcmask 261120
    %46 = vst.msk [vmem:[#allocation9] sm:$0xff] %vm45, %v43
    %47 = vst.msk [vmem:[#allocation9 + $0x8] sm:$0xff] %vm45, %v44
    // Predicated region
    $region18: #{tpu_custom_call.1} parent=1 // pred_check
      _
    $region19: #{tpu_custom_call.1} parent=1 // pred_check_branch
      %49 = sbr.rel (0) target = $region21
    $region20: #{tpu_custom_call.1} parent=1 // pred_region
      %s51 = ssub.s32 256, 256
      %52 = vsyncadd [#allocation6], %s51
      %s53 = sshll.u32 [#allocation9], 4
      %s54 = int_to_ptr.vmem [resolvable:$true] %s53
      %59 = dma.vmem_to_hbm [thread:$0]  %s54, 256, %s3, [#allocation6], 128, 128, 8
    $region21: #{tpu_custom_call.1} parent=1 // pred_fallthru
      _
    // Predicated region
    $region22: #{tpu_custom_call.1} parent=1 // pred_check
      _
    $region23: #{tpu_custom_call.1} parent=1 // pred_check_branch
      %61 = sbr.rel (0) target = $region25
    $region24: #{tpu_custom_call.1} parent=1 // pred_region
      %62 = dma.done [#allocation6], 256
    $region25: #{tpu_custom_call.1} parent=1 // pred_fallthru
      _
    %63 = vsyncpa [#allocation5], 1
    %64 = vsyncpa [#allocation8], 1
    %65 = vsyncpa [#allocation6], 1

</llo_original>
